<compile_context>
chip_gen: v7x
topology: tpu7x:2x2x1
jax: 0.10.0
libtpu: 0.0.40
codegen_flags: <defaults>
</compile_context>

<pallas_src>
from functools import partial

import jax
import jax.numpy as jnp
from jax.experimental import pallas as pl
from jax.experimental.pallas import tpu as pltpu


def _bce_sum(x, y, keep=None):
    # Numerically stable BCE-with-logits, summed:
    #   max(x,0) - x*y + log(1 + exp(-|x|))
    # exp argument is <= 0 so log(1 + e) is well behaved; log1p avoided to keep
    # the Mosaic lowering on guaranteed-supported primitives.
    t = jnp.maximum(x, 0.0) - x * y + jnp.log(1.0 + jnp.exp(-jnp.abs(x)))
    if keep is not None:
        t = jnp.where(keep, t, 0.0)
    return jnp.sum(t)


def _or_fold_to_128(m):
    # Bitwise-OR fold of an (B, T) int32 tile down to (B, 128).
    # T is a power of two >= 128 (guaranteed by the wrapper).
    w = m.shape[1]
    while w > 128:
        h = w // 2
        m = jnp.bitwise_or(m[:, :h], m[:, h:w])
        w = h
    return m


def aux_se_loss_kernel(out0_ref, out1_ref, out2_ref, tgt_ref, loss_ref,
                       sum_sc, pres_sc, *,
                       n_classes, hw, tile, aux_weight, se_weight, needs_mask):
    i = pl.program_id(0)
    n_i = pl.num_programs(0)

    @pl.when(i == 0)
    def _init():
        sum_sc[0] = jnp.float32(0.0)
        sum_sc[1] = jnp.float32(0.0)
        pres_sc[...] = jnp.zeros_like(pres_sc)

    x0 = out0_ref[...].astype(jnp.float32)   # (B, T)
    x1 = out1_ref[...].astype(jnp.float32)   # (B, T)
    y = tgt_ref[...].astype(jnp.float32)     # (B, T)
    B, T = x0.shape
    C = n_classes

    if needs_mask:
        col = jax.lax.broadcasted_iota(jnp.int32, (B, T), 1) + i * tile
        keep = col < hw
    else:
        keep = None

    # --- BCE partial sums (main + aux) accumulated in SMEM scalars ---
    sum_sc[0] += _bce_sum(x0, y, keep)
    sum_sc[1] += _bce_sum(x1, y, keep)

    # --- class-presence histogram as a single-pass bitmask (C <= 32) ---
    # torch.histc(t, bins=C, min=0, max=C-1): width=(C-1)/C, values outside
    # [0, C-1] ignored, v == C-1 lands in the last bin.
    inv_width = float(C) / float(C - 1)
    bin_i = jnp.clip(jnp.floor(y * inv_width), 0.0, float(C - 1)).astype(jnp.int32)
    in_range = (y >= 0.0) & (y <= float(C - 1))
    if keep is not None:
        in_range = in_range & keep
    bits = jnp.where(in_range, jnp.left_shift(jnp.int32(1), bin_i), 0)
    pres_sc[...] = jnp.bitwise_or(pres_sc[...], _or_fold_to_128(bits))

    # --- finalize: SE BCE + single scalar output write ---
    @pl.when(i == n_i - 1)
    def _finalize():
        m = pres_sc[...]                                        # (B, 128) int32
        cols = []
        for c in range(C):                                      # tiny, finalize-only
            bit = jnp.bitwise_and(jnp.right_shift(m, c), 1)     # (B, 128)
            cols.append(jnp.max(bit, axis=1, keepdims=True))    # (B, 1)
        se_tgt = jnp.concatenate(cols, axis=1).astype(jnp.float32)   # (B, C)

        x2 = out2_ref[...].astype(jnp.float32)                  # (B, C)
        se_sum = _bce_sum(x2, se_tgt)

        inv_main = 1.0 / (float(B) * float(hw))
        inv_se = 1.0 / (float(B) * float(C))
        loss_ref[0, 0] = (sum_sc[0] * inv_main
                          + aux_weight * (sum_sc[1] * inv_main)
                          + se_weight * (se_sum * inv_se))


def aux_se_loss(out0, out1, out2, targets, *, n_classes,
                aux_weight=0.4, se_weight=0.2, tile_hw=2048):
    """outputs = (out0, out1, out2); out0/out1/targets: (B, H, W), out2: (B, n_classes)."""
    if n_classes < 2 or n_classes > 32:
        # TODO(synk): n_classes > 32 needs a multi-word presence bitmask.
        raise NotImplementedError("aux_se_loss supports 2 <= n_classes <= 32")

    B = out0.shape[0]
    x0 = out0.reshape(B, -1)          # keep native dtype; cast inside the kernel
    x1 = out1.reshape(B, -1)
    tg = targets.reshape(B, -1)
    HW = x0.shape[1]

    # Lane tile: power of two, >= 128, <= tile_hw, no bigger than needed.
    T = int(min(pl.next_power_of_2(int(tile_hw)), pl.next_power_of_2(int(HW))))
    T = max(T, 128)
    num_tiles = int(pl.cdiv(HW, T))
    padded = num_tiles * T
    needs_mask = padded != HW
    if needs_mask:
        pad = ((0, 0), (0, padded - HW))
        x0 = jnp.pad(x0, pad)
        x1 = jnp.pad(x1, pad)
        tg = jnp.pad(tg, pad)

    kernel = partial(aux_se_loss_kernel,
                     n_classes=int(n_classes), hw=int(HW), tile=T,
                     aux_weight=float(aux_weight), se_weight=float(se_weight),
                     needs_mask=needs_mask)

    # 3 pipelined inputs x 2 buffers x (B, T) blocks + small residents; cap with
    # headroom well under v7x's 64 MiB physical VMEM.
    block_bytes = B * T * 4
    vmem_limit = int(min(48 * 1024 * 1024, max(4 * 1024 * 1024, 12 * block_bytes)))

    loss = pl.pallas_call(
        kernel,
        out_shape=jax.ShapeDtypeStruct((1, 1), jnp.float32),
        grid=(num_tiles,),
        in_specs=[
            pl.BlockSpec((B, T), lambda i: (0, i)),            # main logits tile
            pl.BlockSpec((B, T), lambda i: (0, i)),            # aux logits tile
            pl.BlockSpec((B, n_classes), lambda i: (0, 0)),    # SE logits, resident
            pl.BlockSpec((B, T), lambda i: (0, i)),            # targets tile
        ],
        out_specs=pl.BlockSpec(memory_space=pltpu.MemorySpace.SMEM),
        scratch_shapes=[
            pltpu.SMEM((2,), jnp.float32),                     # [main_sum, aux_sum]
            pltpu.VMEM((B, 128), jnp.int32),                   # presence bitmask
        ],
        compiler_params=pltpu.CompilerParams(
            dimension_semantics=("arbitrary",),
            vmem_limit_bytes=vmem_limit),
    )(x0, x1, out2, tg)
    return loss[0, 0]


def _reference(out0, out1, out2, targets, n_classes, aux_weight, se_weight):
    # Pure-JAX reference matching the PyTorch module.
    def bce_mean(x, y):
        x = x.astype(jnp.float32)
        y = y.astype(jnp.float32)
        return jnp.mean(jnp.maximum(x, 0.0) - x * y
                        + jnp.log(1.0 + jnp.exp(-jnp.abs(x))))

    B = out0.shape[0]
    t = targets.reshape(B, -1).astype(jnp.float32)
    width = (n_classes - 1.0) / n_classes
    bins = jnp.clip(jnp.floor(t / width), 0, n_classes - 1).astype(jnp.int32)
    valid = ((t >= 0) & (t <= n_classes - 1)).astype(jnp.float32)
    onehot = jax.nn.one_hot(bins, n_classes, dtype=jnp.float32) * valid[..., None]
    se_tgt = (jnp.sum(onehot, axis=1) > 0).astype(jnp.float32)
    return (bce_mean(out0, targets)
            + aux_weight * bce_mean(out1, targets)
            + se_weight * bce_mean(out2, se_tgt))


if __name__ == "__main__":
    key = jax.random.PRNGKey(0)
    k0, k1, k2, k3 = jax.random.split(key, 4)

    B, C, H, W = 2, 4, 16, 16
    out0 = jax.random.normal(k0, (B, H, W), dtype=jnp.float32)   # main logits
    out1 = jax.random.normal(k1, (B, H, W), dtype=jnp.float32)   # aux logits
    out2 = jax.random.normal(k2, (B, C), dtype=jnp.float32)      # SE logits
    targets = jax.random.randint(k3, (B, H, W), 0, C).astype(jnp.float32)

    loss = aux_se_loss(out0, out1, out2, targets,
                       n_classes=C, aux_weight=0.4, se_weight=0.2)
    jax.block_until_ready(loss)

    ref = _reference(out0, out1, out2, targets, C, 0.4, 0.2)
    assert abs(float(loss) - float(ref)) < 1e-4, (float(loss), float(ref))
    print("KERNEL_OK")
</pallas_src>

<mosaic_0001>
module attributes {stable_mosaic.version = 11 : i64} {
  func.func @aux_se_loss_kernel(%arg0: i32, %arg1: memref<2x256xf32, #tpu.memory_space<vmem>>, %arg2: memref<2x256xf32, #tpu.memory_space<vmem>>, %arg3: memref<2x4xf32, #tpu.memory_space<vmem>>, %arg4: memref<2x256xf32, #tpu.memory_space<vmem>>, %arg5: memref<1x1xf32, #tpu.memory_space<smem>>, %arg6: memref<2xf32, #tpu.memory_space<smem>>, %arg7: memref<2x128xi32, #tpu.memory_space<vmem>>) attributes {dimension_semantics = [#tpu.dimension_semantics<arbitrary>], iteration_bounds = array<i64: 1>, scalar_prefetch = 0 : i64, scratch_operands = 2 : i64, tpu.core_type = #tpu.core_type<tc>, window_params = [{transform_indices = @transform_0, window_bounds = array<i64: 2, 256>}, {transform_indices = @transform_1, window_bounds = array<i64: 2, 256>}, {pipeline_mode = #tpu.pipeline_mode<synchronous>, transform_indices = @transform_2, window_bounds = array<i64: 2, 4>}, {transform_indices = @transform_3, window_bounds = array<i64: 2, 256>}, {transform_indices = @transform_4, window_bounds = array<i64: 1, 1>}]} {
    %c0_i32 = arith.constant 0 : i32
    %0 = arith.cmpi eq, %arg0, %c0_i32 : i32
    %1 = arith.extui %0 : i1 to i32
    %c0_i32_0 = arith.constant 0 : i32
    %2 = arith.cmpi ne, %1, %c0_i32_0 : i32
    scf.if %2 {
      %cst_28 = arith.constant 0.000000e+00 : f32
      %c0_29 = arith.constant 0 : index
      %70 = memref.load %arg6[%c0_29] : memref<2xf32, #tpu.memory_space<smem>>
      memref.store %cst_28, %arg6[%c0_29] : memref<2xf32, #tpu.memory_space<smem>>
      %cst_30 = arith.constant 0.000000e+00 : f32
      %c1_31 = arith.constant 1 : index
      %71 = memref.load %arg6[%c1_31] : memref<2xf32, #tpu.memory_space<smem>>
      memref.store %cst_30, %arg6[%c1_31] : memref<2xf32, #tpu.memory_space<smem>>
      %c0_i32_32 = arith.constant 0 : i32
      %72 = vector.broadcast %c0_i32_32 : i32 to vector<2x128xi32>
      %c0_33 = arith.constant 0 : index
      %c0_34 = arith.constant 0 : index
      %73 = vector.load %arg7[%c0_33, %c0_34] : memref<2x128xi32, #tpu.memory_space<vmem>>, vector<2x128xi32>
      tpu.vector_store %arg7[%c0_33, %c0_34], %72 {strides = array<i32>} : memref<2x128xi32, #tpu.memory_space<vmem>>, vector<2x128xi32>,
    } else {
    }
    %c0 = arith.constant 0 : index
    %c0_1 = arith.constant 0 : index
    %3 = vector.load %arg1[%c0, %c0_1] : memref<2x256xf32, #tpu.memory_space<vmem>>, vector<2x256xf32>
    %c0_2 = arith.constant 0 : index
    %c0_3 = arith.constant 0 : index
    %4 = vector.load %arg2[%c0_2, %c0_3] : memref<2x256xf32, #tpu.memory_space<vmem>>, vector<2x256xf32>
    %c0_4 = arith.constant 0 : index
    %c0_5 = arith.constant 0 : index
    %5 = vector.load %arg4[%c0_4, %c0_5] : memref<2x256xf32, #tpu.memory_space<vmem>>, vector<2x256xf32>
    %c0_6 = arith.constant 0 : index
    %6 = memref.load %arg6[%c0_6] : memref<2xf32, #tpu.memory_space<smem>>
    %cst = arith.constant 0.000000e+00 : f32
    %7 = vector.broadcast %cst : f32 to vector<2x256xf32>
    %8 = arith.maximumf %3, %7 : vector<2x256xf32>
    %9 = arith.mulf %3, %5 : vector<2x256xf32>
    %10 = arith.subf %8, %9 : vector<2x256xf32>
    %11 = math.absf %3 : vector<2x256xf32>
    %cst_7 = arith.constant 0.000000e+00 : f32
    %12 = vector.broadcast %cst_7 : f32 to vector<2x256xf32>
    %13 = arith.subf %12, %11 : vector<2x256xf32>
    %14 = math.exp %13 : vector<2x256xf32>
    %cst_8 = arith.constant 1.000000e+00 : f32
    %15 = vector.broadcast %cst_8 : f32 to vector<2x256xf32>
    %16 = arith.addf %15, %14 : vector<2x256xf32>
    %17 = math.log %16 : vector<2x256xf32>
    %18 = arith.addf %10, %17 : vector<2x256xf32>
    %19 = vector.shape_cast %18 : vector<2x256xf32> to vector<1x2x256xf32>
    %cst_9 = arith.constant dense<0.000000e+00> : vector<1xf32>
    %20 = vector.multi_reduction <add>, %19, %cst_9 [1, 2] : vector<1x2x256xf32> to vector<1xf32>
    %21 = vector.shape_cast %20 : vector<1xf32> to vector<1x1x1xf32>
    %22 = vector.extract %21[0, 0, 0] : f32 from vector<1x1x1xf32>
    %23 = arith.addf %6, %22 : f32
    %c0_10 = arith.constant 0 : index
    %24 = memref.load %arg6[%c0_10] : memref<2xf32, #tpu.memory_space<smem>>
    memref.store %23, %arg6[%c0_10] : memref<2xf32, #tpu.memory_space<smem>>
    %c1 = arith.constant 1 : index
    %25 = memref.load %arg6[%c1] : memref<2xf32, #tpu.memory_space<smem>>
    %cst_11 = arith.constant 0.000000e+00 : f32
    %26 = vector.broadcast %cst_11 : f32 to vector<2x256xf32>
    %27 = arith.maximumf %4, %26 : vector<2x256xf32>
    %28 = arith.mulf %4, %5 : vector<2x256xf32>
    %29 = arith.subf %27, %28 : vector<2x256xf32>
    %30 = math.absf %4 : vector<2x256xf32>
    %cst_12 = arith.constant 0.000000e+00 : f32
    %31 = vector.broadcast %cst_12 : f32 to vector<2x256xf32>
    %32 = arith.subf %31, %30 : vector<2x256xf32>
    %33 = math.exp %32 : vector<2x256xf32>
    %cst_13 = arith.constant 1.000000e+00 : f32
    %34 = vector.broadcast %cst_13 : f32 to vector<2x256xf32>
    %35 = arith.addf %34, %33 : vector<2x256xf32>
    %36 = math.log %35 : vector<2x256xf32>
    %37 = arith.addf %29, %36 : vector<2x256xf32>
    %38 = vector.shape_cast %37 : vector<2x256xf32> to vector<1x2x256xf32>
    %cst_14 = arith.constant dense<0.000000e+00> : vector<1xf32>
    %39 = vector.multi_reduction <add>, %38, %cst_14 [1, 2] : vector<1x2x256xf32> to vector<1xf32>
    %40 = vector.shape_cast %39 : vector<1xf32> to vector<1x1x1xf32>
    %41 = vector.extract %40[0, 0, 0] : f32 from vector<1x1x1xf32>
    %42 = arith.addf %25, %41 : f32
    %c1_15 = arith.constant 1 : index
    %43 = memref.load %arg6[%c1_15] : memref<2xf32, #tpu.memory_space<smem>>
    memref.store %42, %arg6[%c1_15] : memref<2xf32, #tpu.memory_space<smem>>
    %cst_16 = arith.constant 1.33333337 : f32
    %44 = vector.broadcast %cst_16 : f32 to vector<2x256xf32>
    %45 = arith.mulf %5, %44 : vector<2x256xf32>
    %46 = math.floor %45 : vector<2x256xf32>
    %cst_17 = arith.constant 0.000000e+00 : f32
    %cst_18 = arith.constant 3.000000e+00 : f32
    %47 = vector.broadcast %cst_17 : f32 to vector<2x256xf32>
    %48 = arith.maximumf %47, %46 : vector<2x256xf32>
    %49 = vector.broadcast %cst_18 : f32 to vector<2x256xf32>
    %50 = arith.minimumf %49, %48 : vector<2x256xf32>
    %51 = arith.fptosi %50 : vector<2x256xf32> to vector<2x256xi32>
    %cst_19 = arith.constant 0.000000e+00 : f32
    %52 = vector.broadcast %cst_19 : f32 to vector<2x256xf32>
    %53 = arith.cmpf oge, %5, %52 : vector<2x256xf32>
    %cst_20 = arith.constant 3.000000e+00 : f32
    %54 = vector.broadcast %cst_20 : f32 to vector<2x256xf32>
    %55 = arith.cmpf ole, %5, %54 : vector<2x256xf32>
    %56 = arith.andi %53, %55 : vector<2x256xi1>
    %c1_i32 = arith.constant 1 : i32
    %57 = vector.broadcast %c1_i32 : i32 to vector<2x256xi32>
    %58 = arith.shli %57, %51 : vector<2x256xi32>
    %c0_i32_21 = arith.constant 0 : i32
    %59 = vector.broadcast %c0_i32_21 : i32 to vector<2x256xi32>
    %60 = arith.select %56, %58, %59 : vector<2x256xi1>, vector<2x256xi32>
    %c0_22 = arith.constant 0 : index
    %c0_23 = arith.constant 0 : index
    %61 = vector.load %arg7[%c0_22, %c0_23] : memref<2x128xi32, #tpu.memory_space<vmem>>, vector<2x128xi32>
    %62 = vector.extract_strided_slice %60 {offsets = [0, 0], sizes = [2, 128], strides = [1, 1]} : vector<2x256xi32> to vector<2x128xi32>
    %63 = vector.extract_strided_slice %60 {offsets = [0, 128], sizes = [2, 128], strides = [1, 1]} : vector<2x256xi32> to vector<2x128xi32>
    %64 = arith.ori %62, %63 : vector<2x128xi32>
    %65 = arith.ori %61, %64 : vector<2x128xi32>
    %c0_24 = arith.constant 0 : index
    %c0_25 = arith.constant 0 : index
    %66 = vector.load %arg7[%c0_24, %c0_25] : memref<2x128xi32, #tpu.memory_space<vmem>>, vector<2x128xi32>
    tpu.vector_store %arg7[%c0_24, %c0_25], %65 {strides = array<i32>} : memref<2x128xi32, #tpu.memory_space<vmem>>, vector<2x128xi32>,
    %c0_i32_26 = arith.constant 0 : i32
    %67 = arith.cmpi eq, %arg0, %c0_i32_26 : i32
    %68 = arith.extui %67 : i1 to i32
    %c0_i32_27 = arith.constant 0 : i32
    %69 = arith.cmpi ne, %68, %c0_i32_27 : i32
    scf.if %69 {
      %c0_28 = arith.constant 0 : index
      %c0_29 = arith.constant 0 : index
      %70 = vector.load %arg7[%c0_28, %c0_29] : memref<2x128xi32, #tpu.memory_space<vmem>>, vector<2x128xi32>
      %c0_i32_30 = arith.constant 0 : i32
      %71 = vector.broadcast %c0_i32_30 : i32 to vector<2x128xi32>
      %72 = arith.shrsi %70, %71 : vector<2x128xi32>
      %c1_i32_31 = arith.constant 1 : i32
      %73 = vector.broadcast %c1_i32_31 : i32 to vector<2x128xi32>
      %74 = arith.andi %72, %73 : vector<2x128xi32>
      %cst_32 = arith.constant dense<-2147483648> : vector<2xi32>
      %75 = vector.multi_reduction <maxsi>, %74, %cst_32 [1] : vector<2x128xi32> to vector<2xi32>
      %76 = vector.shape_cast %75 : vector<2xi32> to vector<2x1xi32>
      %c1_i32_33 = arith.constant 1 : i32
      %77 = vector.broadcast %c1_i32_33 : i32 to vector<2x128xi32>
      %78 = arith.shrsi %70, %77 : vector<2x128xi32>
      %c1_i32_34 = arith.constant 1 : i32
      %79 = vector.broadcast %c1_i32_34 : i32 to vector<2x128xi32>
      %80 = arith.andi %78, %79 : vector<2x128xi32>
      %cst_35 = arith.constant dense<-2147483648> : vector<2xi32>
      %81 = vector.multi_reduction <maxsi>, %80, %cst_35 [1] : vector<2x128xi32> to vector<2xi32>
      %82 = vector.shape_cast %81 : vector<2xi32> to vector<2x1xi32>
      %c2_i32 = arith.constant 2 : i32
      %83 = vector.broadcast %c2_i32 : i32 to vector<2x128xi32>
      %84 = arith.shrsi %70, %83 : vector<2x128xi32>
      %c1_i32_36 = arith.constant 1 : i32
      %85 = vector.broadcast %c1_i32_36 : i32 to vector<2x128xi32>
      %86 = arith.andi %84, %85 : vector<2x128xi32>
      %cst_37 = arith.constant dense<-2147483648> : vector<2xi32>
      %87 = vector.multi_reduction <maxsi>, %86, %cst_37 [1] : vector<2x128xi32> to vector<2xi32>
      %88 = vector.shape_cast %87 : vector<2xi32> to vector<2x1xi32>
      %c3_i32 = arith.constant 3 : i32
      %89 = vector.broadcast %c3_i32 : i32 to vector<2x128xi32>
      %90 = arith.shrsi %70, %89 : vector<2x128xi32>
      %c1_i32_38 = arith.constant 1 : i32
      %91 = vector.broadcast %c1_i32_38 : i32 to vector<2x128xi32>
      %92 = arith.andi %90, %91 : vector<2x128xi32>
      %cst_39 = arith.constant dense<-2147483648> : vector<2xi32>
      %93 = vector.multi_reduction <maxsi>, %92, %cst_39 [1] : vector<2x128xi32> to vector<2xi32>
      %94 = vector.shape_cast %93 : vector<2xi32> to vector<2x1xi32>
      %95 = tpu.concatenate %76, %82, %88, %94 in 1 : vector<2x1xi32>, vector<2x1xi32>, vector<2x1xi32>, vector<2x1xi32> -> vector<2x4xi32>
      %96 = arith.sitofp %95 : vector<2x4xi32> to vector<2x4xf32>
      %c0_40 = arith.constant 0 : index
      %c0_41 = arith.constant 0 : index
      %97 = vector.load %arg3[%c0_40, %c0_41] : memref<2x4xf32, #tpu.memory_space<vmem>>, vector<2x4xf32>
      %cst_42 = arith.constant 0.000000e+00 : f32
      %98 = vector.broadcast %cst_42 : f32 to vector<2x4xf32>
      %99 = arith.maximumf %97, %98 : vector<2x4xf32>
      %100 = arith.mulf %97, %96 : vector<2x4xf32>
      %101 = arith.subf %99, %100 : vector<2x4xf32>
      %102 = math.absf %97 : vector<2x4xf32>
      %cst_43 = arith.constant 0.000000e+00 : f32
      %103 = vector.broadcast %cst_43 : f32 to vector<2x4xf32>
      %104 = arith.subf %103, %102 : vector<2x4xf32>
      %105 = math.exp %104 : vector<2x4xf32>
      %cst_44 = arith.constant 1.000000e+00 : f32
      %106 = vector.broadcast %cst_44 : f32 to vector<2x4xf32>
      %107 = arith.addf %106, %105 : vector<2x4xf32>
      %108 = math.log %107 : vector<2x4xf32>
      %109 = arith.addf %101, %108 : vector<2x4xf32>
      %110 = vector.shape_cast %109 : vector<2x4xf32> to vector<1x2x4xf32>
      %cst_45 = arith.constant dense<0.000000e+00> : vector<1xf32>
      %111 = vector.multi_reduction <add>, %110, %cst_45 [1, 2] : vector<1x2x4xf32> to vector<1xf32>
      %112 = vector.shape_cast %111 : vector<1xf32> to vector<1x1x1xf32>
      %113 = vector.extract %112[0, 0, 0] : f32 from vector<1x1x1xf32>
      %c0_46 = arith.constant 0 : index
      %114 = memref.load %arg6[%c0_46] : memref<2xf32, #tpu.memory_space<smem>>
      %cst_47 = arith.constant 0.001953125 : f32
      %115 = arith.mulf %114, %cst_47 : f32
      %c1_48 = arith.constant 1 : index
      %116 = memref.load %arg6[%c1_48] : memref<2xf32, #tpu.memory_space<smem>>
      %cst_49 = arith.constant 0.001953125 : f32
      %117 = arith.mulf %116, %cst_49 : f32
      %cst_50 = arith.constant 4.000000e-01 : f32
      %118 = arith.mulf %cst_50, %117 : f32
      %119 = arith.addf %115, %118 : f32
      %cst_51 = arith.constant 1.250000e-01 : f32
      %120 = arith.mulf %113, %cst_51 : f32
      %cst_52 = arith.constant 2.000000e-01 : f32
      %121 = arith.mulf %cst_52, %120 : f32
      %122 = arith.addf %119, %121 : f32
      %c0_53 = arith.constant 0 : index
      %c0_54 = arith.constant 0 : index
      %123 = memref.load %arg5[%c0_53, %c0_54] : memref<1x1xf32, #tpu.memory_space<smem>>
      memref.store %122, %arg5[%c0_53, %c0_54] : memref<1x1xf32, #tpu.memory_space<smem>>
    } else {
    }
    return
  }
  func.func @transform_0(%arg0: i32) -> (i32, i32) {
    %c0_i32 = arith.constant 0 : i32
    %c0_i32_0 = arith.constant 0 : i32
    return %c0_i32, %arg0 : i32, i32
  }
  func.func @transform_1(%arg0: i32) -> (i32, i32) {
    %c0_i32 = arith.constant 0 : i32
    %c0_i32_0 = arith.constant 0 : i32
    return %c0_i32, %arg0 : i32, i32
  }
  func.func @transform_2(%arg0: i32) -> (i32, i32) {
    %c0_i32 = arith.constant 0 : i32
    %c0_i32_0 = arith.constant 0 : i32
    %c0_i32_1 = arith.constant 0 : i32
    return %c0_i32, %c0_i32_0 : i32, i32
  }
  func.func @transform_3(%arg0: i32) -> (i32, i32) {
    %c0_i32 = arith.constant 0 : i32
    %c0_i32_0 = arith.constant 0 : i32
    return %c0_i32, %arg0 : i32, i32
  }
  func.func @transform_4(%arg0: i32) -> (i32, i32) {
    %c0_i32 = arith.constant 0 : i32
    %c0_i32_0 = arith.constant 0 : i32
    %c0_i32_1 = arith.constant 0 : i32
    return %c0_i32, %c0_i32_0 : i32, i32
  }
}

</mosaic_0001>

<llo_original>
// kernel: tpu_custom_call.1
$region0: #{tpu_custom_call.1}
  #allocation0 [shape = 'u32[]', space=smem, size = 0x4, offset = 0x4, fixed_abs, tag = 'smem constant byte address 0x4 - core index']
  #allocation1 [shape = 'u32[144,128]{1,0:T(1,128)}', space=vmem, size = 0x12000, scoped, tag = 'internal scratch']
  #allocation2 [shape = 'f32[2]{0:T(128)}', space=smem, size = 0x200, scoped, tag = 'scratch operand']
  #allocation3 [shape = 's32[2,128]{1,0:T(2,128)}', space=vmem, size = 0x400, scoped, tag = 'scratch operand']
  %s0 = inlined_call_operand.hbm [shape: f32[2,256], index: 0, kind: input, shape index: {}]
  %s1 = inlined_call_operand.hbm [shape: f32[2,256], index: 1, kind: input, shape index: {}]
  %s2 = inlined_call_operand.vmem [shape: f32[2,4], index: 2, kind: input, shape index: {}]
  %s3 = inlined_call_operand.vmem [shape: f32[2,256], index: 3, kind: input, shape index: {}]
  %s4 = inlined_call_operand.hbm [shape: f32[1,1], index: 4, kind: output, shape index: {}]
  %s5 = sld [smem:[#allocation0]]
  $region42: #{tpu_custom_call.1} parent=0
    _
  %s7 = ssub.s32 1, %s5
  %s8 = scalar_select 0, %s7, %s5
  $region1: #{tpu_custom_call.1} parent=0
    #allocation4 [shape = 'u8[2048]{0}', space=vmem, size = 0x800, scoped, tag = 'input window, operand 0, single buffered']
    #allocation5 [shape = 's32[1]{0}', space=sflag, size = 0x4, scoped, tag = 'scoped memory for tpu_custom_call.1']
    #allocation6 [shape = 's32[1]{0}', space=sflag, size = 0x4, scoped, tag = 'scoped memory for tpu_custom_call.1']
    #allocation7 [shape = 'u8[2048]{0}', space=vmem, size = 0x800, scoped, tag = 'input window, operand 1, single buffered']
    #allocation8 [shape = 's32[1]{0}', space=sflag, size = 0x4, scoped, tag = 'scoped memory for tpu_custom_call.1']
    #allocation9 [shape = 'u8[512]{0}', space=smem, size = 0x200, scoped, tag = 'output window, operand 0, single buffered']
    %9 = vsyncpa [#allocation5], 0
    %10 = vsyncpa [#allocation8], 0
    %11 = vsyncpa [#allocation6], 0
    // Predicated region
    $region2: #{tpu_custom_call.1} parent=1 // pred_check
      _
    $region3: #{tpu_custom_call.1} parent=1 // pred_check_branch
      %13 = sbr.rel (0) target = $region5
    $region4: #{tpu_custom_call.1} parent=1 // pred_region
      %s15 = ssub.s32 64, 64
      %16 = vsyncadd [#allocation5], %s15
      %s18 = sshll.u32 [#allocation4], 4
      %s19 = int_to_ptr.vmem [resolvable:$true] %s18
      %21 = dma.hbm_to_vmem [thread:$0]  %s0, 64, %s19, [#allocation5]
    $region5: #{tpu_custom_call.1} parent=1 // pred_fallthru
      _
    // Predicated region
    $region6: #{tpu_custom_call.1} parent=1 // pred_check
      _
    $region7: #{tpu_custom_call.1} parent=1 // pred_check_branch
      %23 = sbr.rel (0) target = $region9
    $region8: #{tpu_custom_call.1} parent=1 // pred_region
      %s25 = ssub.s32 64, 64
      %26 = vsyncadd [#allocation8], %s25
      %s28 = sshll.u32 [#allocation7], 4
      %s29 = int_to_ptr.vmem [resolvable:$true] %s28
      %31 = dma.hbm_to_vmem [thread:$0]  %s1, 64, %s29, [#allocation8]
    $region9: #{tpu_custom_call.1} parent=1 // pred_fallthru
      _
    // Predicated region
    $region10: #{tpu_custom_call.1} parent=1 // pred_check
      _
    $region11: #{tpu_custom_call.1} parent=1 // pred_check_branch
      %33 = sbr.rel (0) target = $region13
    $region12: #{tpu_custom_call.1} parent=1 // pred_region
      _
    $region13: #{tpu_custom_call.1} parent=1 // pred_fallthru
      _
    // Predicated region
    $region14: #{tpu_custom_call.1} parent=1 // pred_check
      _
    $region15: #{tpu_custom_call.1} parent=1 // pred_check_branch
      %35 = sbr.rel (0) target = $region17
    $region16: #{tpu_custom_call.1} parent=1 // pred_region
      _
    $region17: #{tpu_custom_call.1} parent=1 // pred_fallthru
      _
    // Predicated region
    $region18: #{tpu_custom_call.1} parent=1 // pred_check
      _
    $region19: #{tpu_custom_call.1} parent=1 // pred_check_branch
      %37 = sbr.rel (0) target = $region21
    $region20: #{tpu_custom_call.1} parent=1 // pred_region
      %38 = dma.done [#allocation5], 64
    $region21: #{tpu_custom_call.1} parent=1 // pred_fallthru
      _
    // Predicated region
    $region22: #{tpu_custom_call.1} parent=1 // pred_check
      _
    $region23: #{tpu_custom_call.1} parent=1 // pred_check_branch
      %40 = sbr.rel (0) target = $region25
    $region24: #{tpu_custom_call.1} parent=1 // pred_region
      %41 = dma.done [#allocation8], 64
    $region25: #{tpu_custom_call.1} parent=1 // pred_fallthru
      _
    %p42 = scmp.eq.s32.totalorder 0, 0
    // Predicated region
    $region26: #{tpu_custom_call.1} parent=1 // pred_check
      %p43 = pneg %p42
    $region27: #{tpu_custom_call.1} parent=1 // pred_check_branch
      %45 = sbr.rel (%p43) target = $region29
    $region28: #{tpu_custom_call.1} parent=1 // pred_region
      %s46 = scalar_lea.smem [#allocation2], 0
      %47 = sst [smem:[%s46]] 0.0
      %s48 = scalar_lea.smem [#allocation2], 1
      %49 = sst [smem:[%s48]] 0.0
      %50 = vst [vmem:[#allocation3] sm:$0x3] 0
    $region29: #{tpu_custom_call.1} parent=1 // pred_fallthru
      _
    %v51 = vld [vmem:[#allocation4] sm:$0xf]
    %v52 = vld [vmem:[#allocation7] sm:$0xf]
    %v53 = vld [vmem:[%s3] sm:$0xf]
    %s54 = sld [smem:[#allocation2]]
    %v55 = vmax.f32 %v51, 0.0
    %v56 = vmul.f32 %v51, %v53
    %v57 = vsub.f32 %v55, %v56
    %v58 = vand.u32 2147483647, %v51
    %v59 = vsub.f32 0.0, %v58
    %v60 = vmul.f32 %v59, 1.442695
    %v61 = vpow.pop %v60
    %v62 = vadd.f32 %v61, 1.0
    %v63 = vlog2.pop %v62
    %v64 = vmul.f32 %v63, 0.6931472
    %v65 = vadd.f32 %v57, %v64
    %v68 = vunpack.c.l.s4 1983009808
    %v69 = vunpack.c.0.s8 %v68
    %v70 = vlaneseq
    %v71 = vshrl.u32 %v70, 7
    %v72 = vsub.s32 %v69, %v71
    %v73 = vrot.slane %v65, %v72
    %v74 = vcombine.high %v73, %v73
    %vm77 = vcmask 1041408
    %v78 = vsel %vm77, %v73, 0.0
    %v79 = vsel %vm77, %v74, 0.0
    %v80 = vadd.f32 %v78, %v79
    %81 = vadd.xlane.f32.xlu0 %v80
    %v82 = vpop.xlane.xlu0 %81
    %v83 = vrot.slane %v82, 4
    %v84 = vadd.f32 %v82, %v83
    %v85 = vrot.slane %v84, 2
    %v86 = vadd.f32 %v84, %v85
    %v87 = vrot.slane %v86, 1
    %v88 = vadd.f32 %v86, %v87
    %s89 = vtos %v88
    %s90 = sadd.f32 %s54, %s89
    %s91 = scalar_lea.smem [#allocation2], 0
    %92 = sst [smem:[%s91]] %s90
    %s93 = sld [smem:[#allocation2 + $0x1]]
    %v94 = vmax.f32 %v52, 0.0
    %v95 = vmul.f32 %v52, %v53
    %v96 = vsub.f32 %v94, %v95
    %v97 = vand.u32 2147483647, %v52
    %v98 = vsub.f32 0.0, %v97
    %v99 = vmul.f32 %v98, 1.442695
    %v100 = vpow.pop %v99
    %v101 = vadd.f32 %v100, 1.0
    %v102 = vlog2.pop %v101
    %v103 = vmul.f32 %v102, 0.6931472
    %v104 = vadd.f32 %v96, %v103
    %v107 = vunpack.c.l.s4 1983009808
    %v108 = vunpack.c.0.s8 %v107
    %v109 = vlaneseq
    %v110 = vshrl.u32 %v109, 7
    %v111 = vsub.s32 %v108, %v110
    %v112 = vrot.slane %v104, %v111
    %v113 = vcombine.high %v112, %v112
    %v116 = vsel %vm77, %v112, 0.0
    %v117 = vsel %vm77, %v113, 0.0
    %v118 = vadd.f32 %v116, %v117
    %119 = vadd.xlane.f32.xlu0 %v118
    %v120 = vpop.xlane.xlu0 %119
    %v121 = vrot.slane %v120, 4
    %v122 = vadd.f32 %v120, %v121
    %v123 = vrot.slane %v122, 2
    %v124 = vadd.f32 %v122, %v123
    %v125 = vrot.slane %v124, 1
    %v126 = vadd.f32 %v124, %v125
    %s127 = vtos %v126
    %s128 = sadd.f32 %s93, %s127
    %s129 = scalar_lea.smem [#allocation2], 1
    %130 = sst [smem:[%s129]] %s128
    %v131 = vmul.f32 %v53, 1.3333334
    %v132 = vfloor.f32 %v131
    %v133 = vmax.f32 %v132, 0.0
    %v134 = vmin.f32 %v133, 3.0
    %v135 = vcvt.f32.s32.to.zero.pseudo %v134
    %vm136 = vcmp.ge.f32.partialorder %v53, 0.0
    %vm137 = vcmp.le.f32.partialorder %v53, 3.0
    %vm138 = vmand %vm136, %vm137
    %v139 = vshll.u32 1, %v135
    %v140 = vsel %vm138, %v139, 0
    %v141 = vld [vmem:[#allocation3] sm:$0x3]
    %v142 = vrot.slane %v140, 2
    %v143 = vor.u32 %v140, %v142
    %v144 = vor.u32 %v141, %v143
    %145 = vst [vmem:[#allocation3] sm:$0x3] %v144
    // Predicated region
    $region30: #{tpu_custom_call.1} parent=1 // pred_check
      %p146 = pneg %p42
    $region31: #{tpu_custom_call.1} parent=1 // pred_check_branch
      %148 = sbr.rel (%p146) target = $region33
    $region32: #{tpu_custom_call.1} parent=1 // pred_region
      %v149 = vld [vmem:[#allocation3] sm:$0x3]
      %v150 = vand.u32 %v149, 1
      %v151 = vsel %vm77, %v150, 2147483648
      %v152 = vand.u32 %v151, 65535
      %v153 = vshra.s32 %v151, 16
      %v154 = vcvt.s32.f32 %v152
      %v155 = vcvt.s32.f32 %v153
      %156 = vmax.xlane.f32.xlu0 %v155
      %v157 = vpop.xlane.xlu0 %156
      %vm158 = vcmp.eq.f32.partialorder %v155, %v157
      %v159 = vsel %vm158, %v154, -inf
      %160 = vmax.xlane.f32.xlu0 %v159
      %v161 = vpop.xlane.xlu0 %160
      %v162 = vcvt.f32.s32 %v161
      %v163 = vcvt.f32.s32 %v157
      %v164 = vshll.u32 %v163, 16
      %v165 = vadd.s32 %v164, %v162
      %v166 = vshra.s32 %v149, 1
      %v167 = vand.u32 %v166, 1
      %v168 = vsel %vm77, %v167, 2147483648
      %v169 = vand.u32 %v168, 65535
      %v170 = vshra.s32 %v168, 16
      %v171 = vcvt.s32.f32 %v169
      %v172 = vcvt.s32.f32 %v170
      %173 = vmax.xlane.f32.xlu0 %v172
      %v174 = vpop.xlane.xlu0 %173
      %vm175 = vcmp.eq.f32.partialorder %v172, %v174
      %v176 = vsel %vm175, %v171, -inf
      %177 = vmax.xlane.f32.xlu0 %v176
      %v178 = vpop.xlane.xlu0 %177
      %v179 = vcvt.f32.s32 %v178
      %v180 = vcvt.f32.s32 %v174
      %v181 = vshll.u32 %v180, 16
      %v182 = vadd.s32 %v181, %v179
      %v183 = vshra.s32 %v149, 2
      %v184 = vand.u32 %v183, 1
      %v185 = vsel %vm77, %v184, 2147483648
      %v186 = vand.u32 %v185, 65535
      %v187 = vshra.s32 %v185, 16
      %v188 = vcvt.s32.f32 %v186
      %v189 = vcvt.s32.f32 %v187
      %190 = vmax.xlane.f32.xlu0 %v189
      %v191 = vpop.xlane.xlu0 %190
      %vm192 = vcmp.eq.f32.partialorder %v189, %v191
      %v193 = vsel %vm192, %v188, -inf
      %194 = vmax.xlane.f32.xlu0 %v193
      %v195 = vpop.xlane.xlu0 %194
      %v196 = vcvt.f32.s32 %v195
      %v197 = vcvt.f32.s32 %v191
      %v198 = vshll.u32 %v197, 16
      %v199 = vadd.s32 %v198, %v196
      %v200 = vshra.s32 %v149, 3
      %v201 = vand.u32 %v200, 1
      %v202 = vsel %vm77, %v201, 2147483648
      %v203 = vand.u32 %v202, 65535
      %v204 = vshra.s32 %v202, 16
      %v205 = vcvt.s32.f32 %v203
      %v206 = vcvt.s32.f32 %v204
      %207 = vmax.xlane.f32.xlu0 %v206
      %v208 = vpop.xlane.xlu0 %207
      %vm209 = vcmp.eq.f32.partialorder %v206, %v208
      %v210 = vsel %vm209, %v205, -inf
      %211 = vmax.xlane.f32.xlu0 %v210
      %v212 = vpop.xlane.xlu0 %211
      %v213 = vcvt.f32.s32 %v212
      %v214 = vcvt.f32.s32 %v208
      %v215 = vshll.u32 %v214, 16
      %v216 = vadd.s32 %v215, %v213
      %vm217 = vcmask 7168
      %v218 = vsel %vm217, %v165, %v182
      %vm219 = vcmask 15360
      %v220 = vsel %vm219, %v218, %v199
      %vm221 = vcmask 23552
      %v222 = vsel %vm221, %v220, %v216
      %v223 = vcvt.s32.f32 %v222
      %v224 = vld [vmem:[%s2] sm:$0x3]
      %v225 = vmax.f32 %v224, 0.0
      %v226 = vmul.f32 %v224, %v223
      %v227 = vsub.f32 %v225, %v226
      %v228 = vand.u32 2147483647, %v224
      %v229 = vsub.f32 0.0, %v228
      %v230 = vmul.f32 %v229, 1.442695
      %v231 = vpow.pop %v230
      %v232 = vadd.f32 %v231, 1.0
      %v233 = vlog2.pop %v232
      %v234 = vmul.f32 %v233, 0.6931472
      %v235 = vadd.f32 %v227, %v234
      %vm236 = vcmask 25600
      %v237 = vsel %vm236, %v235, 0.0
      %238 = vadd.xlane.f32.xlu0 %v237
      %v239 = vpop.xlane.xlu0 %238
      %v240 = vrot.slane %v239, 4
      %v241 = vadd.f32 %v239, %v240
      %v242 = vrot.slane %v241, 2
      %v243 = vadd.f32 %v241, %v242
      %v244 = vrot.slane %v243, 1
      %v245 = vadd.f32 %v243, %v244
      %s246 = vtos %v245
      %s247 = sld [smem:[#allocation2]]
      %s248 = smul.f32 %s247, 0.001953125
      %s249 = sld [smem:[#allocation2 + $0x1]]
      %s250 = smul.f32 %s249, 0.001953125
      %s251 = smul.f32 %s250, 0.4
      %s252 = sadd.f32 %s248, %s251
      %s253 = smul.f32 %s246, 0.125
      %s254 = smul.f32 %s253, 0.2
      %s255 = sadd.f32 %s252, %s254
      %s256 = scalar_lea.smem [#allocation9], 0
      %257 = sst [smem:[%s256]] %s255
    $region33: #{tpu_custom_call.1} parent=1 // pred_fallthru
      _
    // Predicated region
    $region34: #{tpu_custom_call.1} parent=1 // pred_check
      _
    $region35: #{tpu_custom_call.1} parent=1 // pred_check_branch
      %259 = sbr.rel (0) target = $region37
    $region36: #{tpu_custom_call.1} parent=1 // pred_region
      %s261 = ssub.s32 16, 16
      %262 = vsyncadd [#allocation6], %s261
      %265 = dma.smem_to_hbm [#allocation9], 16, %s4, [#allocation6]
    $region37: #{tpu_custom_call.1} parent=1 // pred_fallthru
      _
    // Predicated region
    $region38: #{tpu_custom_call.1} parent=1 // pred_check
      _
    $region39: #{tpu_custom_call.1} parent=1 // pred_check_branch
      %267 = sbr.rel (0) target = $region41
    $region40: #{tpu_custom_call.1} parent=1 // pred_region
      %268 = dma.done [#allocation6], 16
    $region41: #{tpu_custom_call.1} parent=1 // pred_fallthru
      _
    %269 = sfence
    %270 = vsyncpa [#allocation5], 1
    %271 = vsyncpa [#allocation8], 1
    %272 = vsyncpa [#allocation6], 1

</llo_original>
